<compile_context>
chip_gen: v6e
topology: v6e:2x2x1
jax: 0.10.0
libtpu: 0.0.40
codegen_flags: <defaults>
</compile_context>

<pallas_src>
import math

import jax
import jax.numpy as jnp
from jax import lax
from jax.experimental import pallas as pl
from jax.experimental.pallas import tpu as pltpu


def _round_up(v, m):
    return (v + m - 1) // m * m


def _mlp_kernel(x_ref, w1_ref, b1_ref, w2_ref, b2_ref, o_ref):
    # x_ref: (tm, Din), w1_ref: (Din, H), b1_ref: (1, H),
    # w2_ref: (H, Dout), b2_ref: (1, Dout), o_ref: (tm, Dout)
    x = x_ref[...]
    w1 = w1_ref[...]
    w2 = w2_ref[...]

    # fc1: MXU matmul, f32 accumulation.
    h = jnp.dot(x, w1, preferred_element_type=jnp.float32)
    h = h + b1_ref[...].astype(jnp.float32)

    # Exact (erf) GELU in f32 — matches torch.nn.GELU() default.
    h = 0.5 * h * (1.0 + lax.erf(h * (1.0 / math.sqrt(2.0))))

    # dropout(p=0.0) is identity -> nothing to do.

    # fc2: cast activation back to weight dtype (bf16 path uses bf16 MXU),
    # accumulate in f32.
    y = jnp.dot(h.astype(w2.dtype), w2, preferred_element_type=jnp.float32)
    y = y + b2_ref[...].astype(jnp.float32)

    o_ref[...] = y.astype(o_ref.dtype)


def mlp_pallas(x, w1, b1, w2, b2, *, tm=256):
    """Mlp forward.  x: (..., Din). w1: (Din, H), b1: (H,), w2: (H, Dout), b2: (Dout,)."""
    orig_shape = x.shape
    din = orig_shape[-1]
    hdim = w1.shape[1]
    dout = w2.shape[1]

    x2 = x.reshape(-1, din)
    m = x2.shape[0]
    dt = x.dtype
    elt = jnp.dtype(dt).itemsize

    # Lane-dense padding of feature dims (multiples of 128).
    din_p = _round_up(din, 128)
    h_p = _round_up(hdim, 128)
    dout_p = _round_up(dout, 128)

    # Row tile: large to amortize per-step overhead, but never bigger than
    # (sublane-padded) M.  Pad M up to a multiple of the tile.
    tm_eff = min(tm, _round_up(m, 8))
    m_p = _round_up(m, tm_eff)

    x_p = jnp.zeros((m_p, din_p), dt).at[:m, :din].set(x2)
    w1_p = jnp.zeros((din_p, h_p), w1.dtype).at[:din, :hdim].set(w1)
    b1_p = jnp.zeros((1, h_p), b1.dtype).at[0, :hdim].set(b1)
    w2_p = jnp.zeros((h_p, dout_p), w2.dtype).at[:hdim, :dout].set(w2)
    b2_p = jnp.zeros((1, dout_p), b2.dtype).at[0, :dout].set(b2)

    def nbytes(a):
        return a.size * a.dtype.itemsize

    # VMEM budget: weights/biases resident (constant index_map), x/out tiles
    # double-buffered, plus the f32 hidden activation.  Cap the limit at
    # 64 MiB so it is valid on v7x as well as v5e/v6e.
    weight_bytes = nbytes(w1_p) + nbytes(b1_p) + nbytes(w2_p) + nbytes(b2_p)
    tile_bytes = tm_eff * (din_p + dout_p) * elt
    vmem_needed = 2 * (weight_bytes + tile_bytes) + 4 * tm_eff * h_p
    vmem_limit = int(min(max(2 * vmem_needed, 32 * 1024 * 1024),
                         64 * 1024 * 1024))

    flops = 2 * m_p * (din_p * h_p + h_p * dout_p)
    bytes_accessed = nbytes(x_p) + weight_bytes + m_p * dout_p * elt
    cost = pl.CostEstimate(flops=flops,
                           transcendentals=m_p * h_p,
                           bytes_accessed=bytes_accessed)

    out = pl.pallas_call(
        _mlp_kernel,
        out_shape=jax.ShapeDtypeStruct((m_p, dout_p), dt),
        grid_spec=pltpu.PrefetchScalarGridSpec(
            num_scalar_prefetch=0,
            grid=(m_p // tm_eff,),
            in_specs=[
                pl.BlockSpec((tm_eff, din_p), lambda i: (i, 0)),
                # Weights / biases: constant index_map -> stay resident in VMEM
                # across all row tiles.
                pl.BlockSpec((din_p, h_p), lambda i: (0, 0)),
                pl.BlockSpec((1, h_p), lambda i: (0, 0)),
                pl.BlockSpec((h_p, dout_p), lambda i: (0, 0)),
                pl.BlockSpec((1, dout_p), lambda i: (0, 0)),
            ],
            out_specs=pl.BlockSpec((tm_eff, dout_p), lambda i: (i, 0)),
        ),
        compiler_params=pltpu.CompilerParams(
            dimension_semantics=("parallel",),  # shards M tiles across v7x's 2 TCs
            vmem_limit_bytes=vmem_limit,
        ),
        cost_estimate=cost,
    )(x_p, w1_p, b1_p, w2_p, b2_p)

    out = out[:m, :dout]
    return out.reshape(*orig_shape[:-1], dout)


def mlp_reference(x, w1, b1, w2, b2):
    h = jnp.dot(x, w1) + b1
    h = 0.5 * h * (1.0 + lax.erf(h / math.sqrt(2.0)))
    return jnp.dot(h, w2) + b2


if __name__ == "__main__":
    key = jax.random.PRNGKey(0)
    batch, seq = 2, 8
    in_features = 32
    hidden_features = 64
    out_features = 32  # out_features defaults to in_features in the module

    kx, kw1, kb1, kw2, kb2 = jax.random.split(key, 5)

    x = jax.random.normal(kx, (batch, seq, in_features), dtype=jnp.float32)
    w1 = jax.random.normal(kw1, (in_features, hidden_features), jnp.float32) * 0.02
    b1 = jax.random.normal(kb1, (hidden_features,), jnp.float32) * 0.02
    w2 = jax.random.normal(kw2, (hidden_features, out_features), jnp.float32) * 0.02
    b2 = jax.random.normal(kb2, (out_features,), jnp.float32) * 0.02

    y_ref = mlp_reference(x, w1, b1, w2, b2)

    # f32 path: exact-GELU semantics, tight tolerance vs reference.
    y = jax.block_until_ready(mlp_pallas(x, w1, b1, w2, b2))
    assert y.shape == (batch, seq, out_features)
    assert jnp.allclose(y, y_ref, atol=1e-5, rtol=1e-5), "f32 mismatch vs reference"

    # bf16 path: bf16 activations/weights on the MXU with f32 accumulation.
    xb = x.astype(jnp.bfloat16)
    yb = jax.block_until_ready(
        mlp_pallas(xb, w1.astype(jnp.bfloat16), b1.astype(jnp.bfloat16),
                   w2.astype(jnp.bfloat16), b2.astype(jnp.bfloat16)))
    assert yb.shape == (batch, seq, out_features)
    assert jnp.allclose(yb.astype(jnp.float32), y_ref, atol=3e-2, rtol=5e-2), \
        "bf16 mismatch vs reference"

    print("KERNEL_OK")
</pallas_src>

<mosaic_0001>
module attributes {stable_mosaic.version = 11 : i64} {
  func.func @_mlp_kernel(%arg0: i32, %arg1: memref<16x128xf32, #tpu.memory_space<vmem>>, %arg2: memref<128x128xf32, #tpu.memory_space<vmem>>, %arg3: memref<1x128xf32, #tpu.memory_space<vmem>>, %arg4: memref<128x128xf32, #tpu.memory_space<vmem>>, %arg5: memref<1x128xf32, #tpu.memory_space<vmem>>, %arg6: memref<16x128xf32, #tpu.memory_space<vmem>>) attributes {dimension_semantics = [#tpu.dimension_semantics<parallel>], iteration_bounds = array<i64: 1>, scalar_prefetch = 0 : i64, scratch_operands = 0 : i64, tpu.core_type = #tpu.core_type<tc>, window_params = [{transform_indices = @transform_0, window_bounds = array<i64: 16, 128>}, {pipeline_mode = #tpu.pipeline_mode<synchronous>, transform_indices = @transform_1, window_bounds = array<i64: 128, 128>}, {pipeline_mode = #tpu.pipeline_mode<synchronous>, transform_indices = @transform_2, window_bounds = array<i64: 1, 128>}, {pipeline_mode = #tpu.pipeline_mode<synchronous>, transform_indices = @transform_3, window_bounds = array<i64: 128, 128>}, {pipeline_mode = #tpu.pipeline_mode<synchronous>, transform_indices = @transform_4, window_bounds = array<i64: 1, 128>}, {transform_indices = @transform_5, window_bounds = array<i64: 16, 128>}]} {
    %c0 = arith.constant 0 : index
    %c0_0 = arith.constant 0 : index
    %0 = vector.load %arg1[%c0, %c0_0] : memref<16x128xf32, #tpu.memory_space<vmem>>, vector<16x128xf32>
    %c0_1 = arith.constant 0 : index
    %c0_2 = arith.constant 0 : index
    %1 = vector.load %arg2[%c0_1, %c0_2] : memref<128x128xf32, #tpu.memory_space<vmem>>, vector<128x128xf32>
    %c0_3 = arith.constant 0 : index
    %c0_4 = arith.constant 0 : index
    %2 = vector.load %arg4[%c0_3, %c0_4] : memref<128x128xf32, #tpu.memory_space<vmem>>, vector<128x128xf32>
    %cst = arith.constant dense<0.000000e+00> : vector<16x128xf32>
    %3 = tpu.matmul %0, %1, %cst {dimension_numbers = #tpu.dot_dimension_numbers<[1], [0], [0], [1], [0, 0, 1, 1], [], []>} : vector<16x128xf32>, vector<128x128xf32>, vector<16x128xf32> -> vector<16x128xf32>
    %c0_5 = arith.constant 0 : index
    %c0_6 = arith.constant 0 : index
    %4 = vector.load %arg3[%c0_5, %c0_6] : memref<1x128xf32, #tpu.memory_space<vmem>>, vector<1x128xf32>
    %5 = vector.broadcast %4 : vector<1x128xf32> to vector<16x128xf32>
    %6 = arith.addf %3, %5 : vector<16x128xf32>
    %cst_7 = arith.constant 5.000000e-01 : f32
    %7 = vector.broadcast %cst_7 : f32 to vector<16x128xf32>
    %8 = arith.mulf %7, %6 : vector<16x128xf32>
    %cst_8 = arith.constant 0.707106769 : f32
    %9 = vector.broadcast %cst_8 : f32 to vector<16x128xf32>
    %10 = arith.mulf %6, %9 : vector<16x128xf32>
    %11 = math.erf %10 : vector<16x128xf32>
    %cst_9 = arith.constant 1.000000e+00 : f32
    %12 = vector.broadcast %cst_9 : f32 to vector<16x128xf32>
    %13 = arith.addf %12, %11 : vector<16x128xf32>
    %14 = arith.mulf %8, %13 : vector<16x128xf32>
    %cst_10 = arith.constant dense<0.000000e+00> : vector<16x128xf32>
    %15 = tpu.matmul %14, %2, %cst_10 {dimension_numbers = #tpu.dot_dimension_numbers<[1], [0], [0], [1], [0, 0, 1, 1], [], []>} : vector<16x128xf32>, vector<128x128xf32>, vector<16x128xf32> -> vector<16x128xf32>
    %c0_11 = arith.constant 0 : index
    %c0_12 = arith.constant 0 : index
    %16 = vector.load %arg5[%c0_11, %c0_12] : memref<1x128xf32, #tpu.memory_space<vmem>>, vector<1x128xf32>
    %17 = vector.broadcast %16 : vector<1x128xf32> to vector<16x128xf32>
    %18 = arith.addf %15, %17 : vector<16x128xf32>
    %c0_13 = arith.constant 0 : index
    %c0_14 = arith.constant 0 : index
    %19 = vector.load %arg6[%c0_13, %c0_14] : memref<16x128xf32, #tpu.memory_space<vmem>>, vector<16x128xf32>
    tpu.vector_store %arg6[%c0_13, %c0_14], %18 {strides = array<i32>} : memref<16x128xf32, #tpu.memory_space<vmem>>, vector<16x128xf32>,
    return
  }
  func.func @transform_0(%arg0: i32) -> (i32, i32) {
    %c0_i32 = arith.constant 0 : i32
    %c0_i32_0 = arith.constant 0 : i32
    return %arg0, %c0_i32 : i32, i32
  }
  func.func @transform_1(%arg0: i32) -> (i32, i32) {
    %c0_i32 = arith.constant 0 : i32
    %c0_i32_0 = arith.constant 0 : i32
    %c0_i32_1 = arith.constant 0 : i32
    return %c0_i32, %c0_i32_0 : i32, i32
  }
  func.func @transform_2(%arg0: i32) -> (i32, i32) {
    %c0_i32 = arith.constant 0 : i32
    %c0_i32_0 = arith.constant 0 : i32
    %c0_i32_1 = arith.constant 0 : i32
    return %c0_i32, %c0_i32_0 : i32, i32
  }
  func.func @transform_3(%arg0: i32) -> (i32, i32) {
    %c0_i32 = arith.constant 0 : i32
    %c0_i32_0 = arith.constant 0 : i32
    %c0_i32_1 = arith.constant 0 : i32
    return %c0_i32, %c0_i32_0 : i32, i32
  }
  func.func @transform_4(%arg0: i32) -> (i32, i32) {
    %c0_i32 = arith.constant 0 : i32
    %c0_i32_0 = arith.constant 0 : i32
    %c0_i32_1 = arith.constant 0 : i32
    return %c0_i32, %c0_i32_0 : i32, i32
  }
  func.func @transform_5(%arg0: i32) -> (i32, i32) {
    %c0_i32 = arith.constant 0 : i32
    %c0_i32_0 = arith.constant 0 : i32
    return %arg0, %c0_i32 : i32, i32
  }
}

</mosaic_0001>

<llo_original>
// kernel: tpu_custom_call.1
$region0: #{tpu_custom_call.1}
  #allocation0 [shape = 'u32[]', space=smem, size = 0x4, offset = 0x4, fixed_abs, tag = 'smem constant byte address 0x4 - core index']
  #allocation1 [shape = 'u32[144,128]{1,0:T(1,128)}', space=vmem, size = 0x12000, scoped, tag = 'internal scratch']
  %s0 = inlined_call_operand.hbm [shape: f32[16,128], index: 0, kind: input, shape index: {}]
  %s1 = inlined_call_operand.hbm [shape: f32[128,128], index: 1, kind: input, shape index: {}]
  %s2 = inlined_call_operand.vmem [shape: f32[1,128], index: 2, kind: input, shape index: {}]
  %s3 = inlined_call_operand.hbm [shape: f32[128,128], index: 3, kind: input, shape index: {}]
  %s4 = inlined_call_operand.vmem [shape: f32[1,128], index: 4, kind: input, shape index: {}]
  %s5 = inlined_call_operand.hbm [shape: f32[16,128], index: 5, kind: output, shape index: {}]
  %s6 = sld [smem:[#allocation0]]
  $region42: #{tpu_custom_call.1} parent=0
    _
  %s8 = ssub.s32 1, %s6
  %s9 = scalar_select 0, %s8, %s6
  $region1: #{tpu_custom_call.1} parent=0
    #allocation2 [shape = 'u8[8192]{0}', space=vmem, size = 0x2000, scoped, tag = 'input window, operand 0, single buffered']
    #allocation3 [shape = 's32[1]{0}', space=sflag, size = 0x4, scoped, tag = 'scoped memory for tpu_custom_call.1']
    #allocation4 [shape = 's32[1]{0}', space=sflag, size = 0x4, scoped, tag = 'scoped memory for tpu_custom_call.1']
    #allocation5 [shape = 'u8[65536]{0}', space=vmem, size = 0x10000, scoped, tag = 'input window, operand 1, single buffered']
    #allocation6 [shape = 's32[1]{0}', space=sflag, size = 0x4, scoped, tag = 'scoped memory for tpu_custom_call.1']
    #allocation7 [shape = 'u8[65536]{0}', space=vmem, size = 0x10000, scoped, tag = 'input window, operand 3, single buffered']
    #allocation8 [shape = 'u8[8192]{0}', space=vmem, size = 0x2000, scoped, tag = 'output window, operand 0, single buffered']
    %10 = vsyncpa [#allocation3], 0
    %11 = vsyncpa [#allocation6], 0
    %12 = vsyncpa [#allocation4], 0
    // Predicated region
    $region2: #{tpu_custom_call.1} parent=1 // pred_check
      _
    $region3: #{tpu_custom_call.1} parent=1 // pred_check_branch
      %14 = sbr.rel (0) target = $region5
    $region4: #{tpu_custom_call.1} parent=1 // pred_region
      %s16 = ssub.s32 256, 256
      %17 = vsyncadd [#allocation3], %s16
      %s18 = sshll.u32 [#allocation2], 4
      %s19 = int_to_ptr.vmem [resolvable:$true] %s18
      %24 = dma.hbm_to_vmem [thread:$0]  %s0, 256, %s19, [#allocation3], 128, 128, 8
    $region5: #{tpu_custom_call.1} parent=1 // pred_fallthru
      _
    // Predicated region
    $region6: #{tpu_custom_call.1} parent=1 // pred_check
      _
    $region7: #{tpu_custom_call.1} parent=1 // pred_check_branch
      %26 = sbr.rel (0) target = $region9
    $region8: #{tpu_custom_call.1} parent=1 // pred_region
      %s28 = ssub.s32 2048, 2048
      %29 = vsyncadd [#allocation6], %s28
      %s30 = sshll.u32 [#allocation5], 4
      %s31 = int_to_ptr.vmem [resolvable:$true] %s30
      %36 = dma.hbm_to_vmem [thread:$0]  %s1, 2048, %s31, [#allocation6], 128, 128, 8
    $region9: #{tpu_custom_call.1} parent=1 // pred_fallthru
      _
    // Predicated region
    $region10: #{tpu_custom_call.1} parent=1 // pred_check
      _
    $region11: #{tpu_custom_call.1} parent=1 // pred_check_branch
      %38 = sbr.rel (0) target = $region13
    $region12: #{tpu_custom_call.1} parent=1 // pred_region
      _
    $region13: #{tpu_custom_call.1} parent=1 // pred_fallthru
      _
    // Predicated region
    $region14: #{tpu_custom_call.1} parent=1 // pred_check
      _
    $region15: #{tpu_custom_call.1} parent=1 // pred_check_branch
      %40 = sbr.rel (0) target = $region17
    $region16: #{tpu_custom_call.1} parent=1 // pred_region
      %s42 = ssub.s32 2048, 2048
      %43 = vsyncadd [#allocation6], %s42
      %s44 = sshll.u32 [#allocation7], 4
      %s45 = int_to_ptr.vmem [resolvable:$true] %s44
      %50 = dma.hbm_to_vmem [thread:$0]  %s3, 2048, %s45, [#allocation6], 128, 128, 8
    $region17: #{tpu_custom_call.1} parent=1 // pred_fallthru
      _
    // Predicated region
    $region18: #{tpu_custom_call.1} parent=1 // pred_check
      _
    $region19: #{tpu_custom_call.1} parent=1 // pred_check_branch
      %52 = sbr.rel (0) target = $region21
    $region20: #{tpu_custom_call.1} parent=1 // pred_region
      _
    $region21: #{tpu_custom_call.1} parent=1 // pred_fallthru
      _
    // Predicated region
    $region22: #{tpu_custom_call.1} parent=1 // pred_check
      _
    $region23: #{tpu_custom_call.1} parent=1 // pred_check_branch
      %54 = sbr.rel (0) target = $region25
    $region24: #{tpu_custom_call.1} parent=1 // pred_region
      %55 = dma.done [#allocation3], 256
    $region25: #{tpu_custom_call.1} parent=1 // pred_fallthru
      _
    // Predicated region
    $region26: #{tpu_custom_call.1} parent=1 // pred_check
      _
    $region27: #{tpu_custom_call.1} parent=1 // pred_check_branch
      %57 = sbr.rel (0) target = $region29
    $region28: #{tpu_custom_call.1} parent=1 // pred_region
      %58 = dma.done [#allocation6], 2048
    $region29: #{tpu_custom_call.1} parent=1 // pred_fallthru
      _
    // Predicated region
    $region30: #{tpu_custom_call.1} parent=1 // pred_check
      _
    $region31: #{tpu_custom_call.1} parent=1 // pred_check_branch
      %60 = sbr.rel (0) target = $region33
    $region32: #{tpu_custom_call.1} parent=1 // pred_region
      %61 = dma.done [#allocation6], 2048
    $region33: #{tpu_custom_call.1} parent=1 // pred_fallthru
      _
    %v62 = vld [vmem:[#allocation2] sm:$0xff]
    %v63 = vld [vmem:[#allocation2 + $0x8] sm:$0xff]
    %v64 = vld [vmem:[#allocation5] sm:$0xff]
    %v65 = vld [vmem:[#allocation5 + $0x8] sm:$0xff]
    %v66 = vld [vmem:[#allocation5 + $0x10] sm:$0xff]
    %v67 = vld [vmem:[#allocation5 + $0x18] sm:$0xff]
    %v68 = vld [vmem:[#allocation5 + $0x20] sm:$0xff]
    %v69 = vld [vmem:[#allocation5 + $0x28] sm:$0xff]
    %v70 = vld [vmem:[#allocation5 + $0x30] sm:$0xff]
    %v71 = vld [vmem:[#allocation5 + $0x38] sm:$0xff]
    %v72 = vld [vmem:[#allocation5 + $0x40] sm:$0xff]
    %v73 = vld [vmem:[#allocation5 + $0x48] sm:$0xff]
    %v74 = vld [vmem:[#allocation5 + $0x50] sm:$0xff]
    %v75 = vld [vmem:[#allocation5 + $0x58] sm:$0xff]
    %v76 = vld [vmem:[#allocation5 + $0x60] sm:$0xff]
    %v77 = vld [vmem:[#allocation5 + $0x68] sm:$0xff]
    %v78 = vld [vmem:[#allocation5 + $0x70] sm:$0xff]
    %v79 = vld [vmem:[#allocation5 + $0x78] sm:$0xff]
    %v80 = vld [vmem:[#allocation7] sm:$0xff]
    %v81 = vld [vmem:[#allocation7 + $0x8] sm:$0xff]
    %v82 = vld [vmem:[#allocation7 + $0x10] sm:$0xff]
    %v83 = vld [vmem:[#allocation7 + $0x18] sm:$0xff]
    %v84 = vld [vmem:[#allocation7 + $0x20] sm:$0xff]
    %v85 = vld [vmem:[#allocation7 + $0x28] sm:$0xff]
    %v86 = vld [vmem:[#allocation7 + $0x30] sm:$0xff]
    %v87 = vld [vmem:[#allocation7 + $0x38] sm:$0xff]
    %v88 = vld [vmem:[#allocation7 + $0x40] sm:$0xff]
    %v89 = vld [vmem:[#allocation7 + $0x48] sm:$0xff]
    %v90 = vld [vmem:[#allocation7 + $0x50] sm:$0xff]
    %v91 = vld [vmem:[#allocation7 + $0x58] sm:$0xff]
    %v92 = vld [vmem:[#allocation7 + $0x60] sm:$0xff]
    %v93 = vld [vmem:[#allocation7 + $0x68] sm:$0xff]
    %v94 = vld [vmem:[#allocation7 + $0x70] sm:$0xff]
    %v95 = vld [vmem:[#allocation7 + $0x78] sm:$0xff]
    %v96 = vld [vmem:[%s2] sm:$0x1]
    %v98 = vlaneseq
    %v99 = vshrl.u32 %v98, 7
    %v100 = vsub.s32 0, %v99
    %v101 = vrot.slane %v96, %v100
    %103 = vmatprep.subr.mxu0 0.0
    %104 = vmatpush1.msra.mxu0 %v79
    %105 = vmatprep.subr.mxu0 0.0
    %106 = vmatpush1.msra.mxu0 %v78
    %107 = vmatprep.subr.mxu0 0.0
    %108 = vmatpush1.msra.mxu0 %v77
    %109 = vmatprep.subr.mxu0 0.0
    %110 = vmatpush1.msra.mxu0 %v76
    %111 = vmatprep.subr.mxu0 0.0
    %112 = vmatpush1.msra.mxu0 %v75
    %113 = vmatprep.subr.mxu0 0.0
    %114 = vmatpush1.msra.mxu0 %v74
    %115 = vmatprep.subr.mxu0 0.0
    %116 = vmatpush1.msra.mxu0 %v73
    %117 = vmatprep.subr.mxu0 0.0
    %118 = vmatpush1.msra.mxu0 %v72
    %119 = vmatprep.subr.mxu0 0.0
    %120 = vmatpush1.msra.mxu0 %v71
    %121 = vmatprep.subr.mxu0 0.0
    %122 = vmatpush1.msra.mxu0 %v70
    %123 = vmatprep.subr.mxu0 0.0
    %124 = vmatpush1.msra.mxu0 %v69
    %125 = vmatprep.subr.mxu0 0.0
    %126 = vmatpush1.msra.mxu0 %v68
    %127 = vmatprep.subr.mxu0 0.0
    %128 = vmatpush1.msra.mxu0 %v67
    %129 = vmatprep.subr.mxu0 0.0
    %130 = vmatpush1.msra.mxu0 %v66
    %131 = vmatprep.subr.mxu0 0.0
    %132 = vmatpush1.msra.mxu0 %v65
    %133 = vmatprep.subr.mxu0 0.0
    %134 = vmatpush1.msra.mxu0 %v64
    %135 = vmatprep.subr.mxu0 0.0
    %136 = vmatpush2.msra.mxu0 0.0
    %137 = vmatprep.subr.mxu0 0.0
    %138 = vmatpush2.msra.mxu0 0.0
    %139 = vmatprep.subr.mxu0 0.0
    %140 = vmatpush2.msra.mxu0 0.0
    %141 = vmatprep.subr.mxu0 0.0
    %142 = vmatpush2.msra.mxu0 0.0
    %143 = vmatprep.subr.mxu0 0.0
    %144 = vmatpush2.msra.mxu0 0.0
    %145 = vmatprep.subr.mxu0 0.0
    %146 = vmatpush2.msra.mxu0 0.0
    %147 = vmatprep.subr.mxu0 0.0
    %148 = vmatpush2.msra.mxu0 0.0
    %149 = vmatprep.subr.mxu0 0.0
    %150 = vmatpush2.msra.mxu0 0.0
    %151 = vmatprep.subr.mxu0 0.0
    %152 = vmatpush2.msra.mxu0 0.0
    %153 = vmatprep.subr.mxu0 0.0
    %154 = vmatpush2.msra.mxu0 0.0
    %155 = vmatprep.subr.mxu0 0.0
    %156 = vmatpush2.msra.mxu0 0.0
    %157 = vmatprep.subr.mxu0 0.0
    %158 = vmatpush2.msra.mxu0 0.0
    %159 = vmatprep.subr.mxu0 0.0
    %160 = vmatpush2.msra.mxu0 0.0
    %161 = vmatprep.subr.mxu0 0.0
    %162 = vmatpush2.msra.mxu0 0.0
    %163 = vmatprep.subr.mxu0 0.0
    %164 = vmatpush2.msra.mxu0 0.0
    %165 = vmatprep.subr.mxu0 0.0
    %166 = vmatpush2.msra.mxu0 0.0
    %167 = vmatprep.mubr.f32.mxu0 0.0
    %168 = vmatmul.mubr.f32.gmra.mxu0 %v62
    %v169 = vpop.f32.mrf.mxu0
    %v170 = vadd.f32 %v101, %v169
    %v171 = vpop.f32.mrf.mxu0
    %172 = vmatprep.mubr.f32.mxu0 0.0
    %173 = vmatmul.mubr.f32.gmra.mxu0 %v63
    %v174 = vpop.f32.mrf.mxu0
    %v175 = vadd.f32 %v101, %v174
    %v176 = vpop.f32.mrf.mxu0
    %177 = vdwg.mxu0
    %v178 = vmul.f32 %v170, 0.5
    %v179 = vmul.f32 %v175, 0.5
    %v180 = vmul.f32 %v170, 0.70710677
    %v181 = vmul.f32 %v175, 0.70710677
    %v182 = verf.f32.pop %v180
    %v183 = verf.f32.pop %v181
    %v184 = vadd.f32 %v182, 1.0
    %v185 = vadd.f32 %v183, 1.0
    %v186 = vmul.f32 %v178, %v184
    %v187 = vmul.f32 %v179, %v185
    %v188 = vld [vmem:[%s4] sm:$0x1]
    %v190 = vlaneseq
    %v191 = vshrl.u32 %v190, 7
    %v192 = vsub.s32 0, %v191
    %v193 = vrot.slane %v188, %v192
    %195 = vmatprep.subr.mxu0 0.0
    %196 = vmatpush1.msra.mxu0 %v95
    %197 = vmatprep.subr.mxu0 0.0
    %198 = vmatpush1.msra.mxu0 %v94
    %199 = vmatprep.subr.mxu0 0.0
    %200 = vmatpush1.msra.mxu0 %v93
    %201 = vmatprep.subr.mxu0 0.0
    %202 = vmatpush1.msra.mxu0 %v92
    %203 = vmatprep.subr.mxu0 0.0
    %204 = vmatpush1.msra.mxu0 %v91
    %205 = vmatprep.subr.mxu0 0.0
    %206 = vmatpush1.msra.mxu0 %v90
    %207 = vmatprep.subr.mxu0 0.0
    %208 = vmatpush1.msra.mxu0 %v89
    %209 = vmatprep.subr.mxu0 0.0
    %210 = vmatpush1.msra.mxu0 %v88
    %211 = vmatprep.subr.mxu0 0.0
    %212 = vmatpush1.msra.mxu0 %v87
    %213 = vmatprep.subr.mxu0 0.0
    %214 = vmatpush1.msra.mxu0 %v86
    %215 = vmatprep.subr.mxu0 0.0
    %216 = vmatpush1.msra.mxu0 %v85
    %217 = vmatprep.subr.mxu0 0.0
    %218 = vmatpush1.msra.mxu0 %v84
    %219 = vmatprep.subr.mxu0 0.0
    %220 = vmatpush1.msra.mxu0 %v83
    %221 = vmatprep.subr.mxu0 0.0
    %222 = vmatpush1.msra.mxu0 %v82
    %223 = vmatprep.subr.mxu0 0.0
    %224 = vmatpush1.msra.mxu0 %v81
    %225 = vmatprep.subr.mxu0 0.0
    %226 = vmatpush1.msra.mxu0 %v80
    %227 = vmatprep.subr.mxu0 0.0
    %228 = vmatpush2.msra.mxu0 0.0
    %229 = vmatprep.subr.mxu0 0.0
    %230 = vmatpush2.msra.mxu0 0.0
    %231 = vmatprep.subr.mxu0 0.0
    %232 = vmatpush2.msra.mxu0 0.0
    %233 = vmatprep.subr.mxu0 0.0
    %234 = vmatpush2.msra.mxu0 0.0
    %235 = vmatprep.subr.mxu0 0.0
    %236 = vmatpush2.msra.mxu0 0.0
    %237 = vmatprep.subr.mxu0 0.0
    %238 = vmatpush2.msra.mxu0 0.0
    %239 = vmatprep.subr.mxu0 0.0
    %240 = vmatpush2.msra.mxu0 0.0
    %241 = vmatprep.subr.mxu0 0.0
    %242 = vmatpush2.msra.mxu0 0.0
    %243 = vmatprep.subr.mxu0 0.0
    %244 = vmatpush2.msra.mxu0 0.0
    %245 = vmatprep.subr.mxu0 0.0
    %246 = vmatpush2.msra.mxu0 0.0
    %247 = vmatprep.subr.mxu0 0.0
    %248 = vmatpush2.msra.mxu0 0.0
    %249 = vmatprep.subr.mxu0 0.0
    %250 = vmatpush2.msra.mxu0 0.0
    %251 = vmatprep.subr.mxu0 0.0
    %252 = vmatpush2.msra.mxu0 0.0
    %253 = vmatprep.subr.mxu0 0.0
    %254 = vmatpush2.msra.mxu0 0.0
    %255 = vmatprep.subr.mxu0 0.0
    %256 = vmatpush2.msra.mxu0 0.0
    %257 = vmatprep.subr.mxu0 0.0
    %258 = vmatpush2.msra.mxu0 0.0
    %259 = vmatprep.mubr.f32.mxu0 0.0
    %260 = vmatmul.mubr.f32.gmra.mxu0 %v186
    %v261 = vpop.f32.mrf.mxu0
    %v262 = vadd.f32 %v193, %v261
    %v263 = vpop.f32.mrf.mxu0
    %264 = vmatprep.mubr.f32.mxu0 0.0
    %265 = vmatmul.mubr.f32.gmra.mxu0 %v187
    %v266 = vpop.f32.mrf.mxu0
    %v267 = vadd.f32 %v193, %v266
    %v268 = vpop.f32.mrf.mxu0
    %269 = vdwg.mxu0
    %270 = vst [vmem:[#allocation8] sm:$0xff] %v262
    %271 = vst [vmem:[#allocation8 + $0x8] sm:$0xff] %v267
    // Predicated region
    $region34: #{tpu_custom_call.1} parent=1 // pred_check
      _
    $region35: #{tpu_custom_call.1} parent=1 // pred_check_branch
      %273 = sbr.rel (0) target = $region37
    $region36: #{tpu_custom_call.1} parent=1 // pred_region
      %s275 = ssub.s32 256, 256
      %276 = vsyncadd [#allocation4], %s275
      %s277 = sshll.u32 [#allocation8], 4
      %s278 = int_to_ptr.vmem [resolvable:$true] %s277
      %283 = dma.vmem_to_hbm [thread:$0]  %s278, 256, %s5, [#allocation4], 128, 128, 8
    $region37: #{tpu_custom_call.1} parent=1 // pred_fallthru
      _
    // Predicated region
    $region38: #{tpu_custom_call.1} parent=1 // pred_check
      _
    $region39: #{tpu_custom_call.1} parent=1 // pred_check_branch
      %285 = sbr.rel (0) target = $region41
    $region40: #{tpu_custom_call.1} parent=1 // pred_region
      %286 = dma.done [#allocation4], 256
    $region41: #{tpu_custom_call.1} parent=1 // pred_fallthru
      _
    %287 = vsyncpa [#allocation3], 1
    %288 = vsyncpa [#allocation6], 1
    %289 = vsyncpa [#allocation4], 1

</llo_original>
